<compile_context>
chip_gen: v6e
topology: v6e:2x2x1
jax: 0.10.0
libtpu: 0.0.40
codegen_flags: <defaults>
</compile_context>

<pallas_src>
import functools

import jax
import jax.numpy as jnp
from jax import lax
from jax.experimental import pallas as pl
from jax.experimental.pallas import tpu as pltpu


def _round_up(a, b):
    return ((a + b - 1) // b) * b


def _bce_tile_kernel(x_ref, t_ref, pw_ref, o_ref, *,
                     rows, hw, tm, tn, ragged_rows, ragged_cols):
    """One (tm, tn) tile of BCE-with-logits; writes a lane-dense partial block.

    x_ref, t_ref : (tm, tn) logits / targets tile (any float dtype)
    pw_ref       : (padded_rows, 1) resident per-row pos_weight column (f32)
    o_ref        : (out_tm, out_tn) per-tile partial sums (f32)
    """
    i = pl.program_id(0)
    j = pl.program_id(1)

    x = x_ref[...].astype(jnp.float32)
    t = t_ref[...].astype(jnp.float32)
    start = pl.multiple_of(i * tm, tm)
    pw = pw_ref[pl.ds(start, tm), :]                 # (tm, 1), lane-broadcast

    # PyTorch BCEWithLogitsLoss (with pos_weight), numerically stable form:
    #   l_w  = 1 + (pos_weight - 1) * target
    #   loss = (1 - target) * x + l_w * (log1p(exp(-|x|)) + max(-x, 0))
    log_weight = 1.0 + (pw - 1.0) * t
    softplus_neg_abs = jnp.log1p(jnp.exp(-jnp.abs(x))) + jnp.maximum(-x, 0.0)
    elem = (1.0 - t) * x + log_weight * softplus_neg_abs      # (tm, tn) f32

    out_tn = 128 if tn % 128 == 0 else tn
    out_tm = 8 if tm % 8 == 0 else tm
    n_lane = tn // out_tn
    n_sub = tm // out_tm

    def reduce_tile(e):
        # Fold 128-lane slabs, then 8-sublane slabs: aligned vreg adds only.
        acc = e[:, 0:out_tn]
        for s in range(1, n_lane):
            acc = acc + e[:, s * out_tn:(s + 1) * out_tn]
        out = acc[0:out_tm, :]
        for s in range(1, n_sub):
            out = out + acc[s * out_tm:(s + 1) * out_tm, :]
        return out

    if not (ragged_rows or ragged_cols):
        o_ref[...] = reduce_tile(elem)
        return

    conds = []
    if ragged_rows:
        conds.append(i == pl.num_programs(0) - 1)
    if ragged_cols:
        conds.append(j == pl.num_programs(1) - 1)
    is_ragged = conds[0]
    for c in conds[1:]:
        is_ragged = jnp.logical_or(is_ragged, c)

    @pl.when(jnp.logical_not(is_ragged))
    def _():
        o_ref[...] = reduce_tile(elem)

    @pl.when(is_ragged)
    def _():
        e = elem
        if ragged_cols:
            lane = j * tn + lax.broadcasted_iota(jnp.int32, (tm, tn), 1)
            e = jnp.where(lane < hw, e, 0.0)
        if ragged_rows:
            row = i * tm + lax.broadcasted_iota(jnp.int32, (tm, tn), 0)
            e = jnp.where(row < rows, e, 0.0)
        o_ref[...] = reduce_tile(e)


def multi_bce_with_logits_loss(input_nchw, target_nchw, pos_weight, *,
                               target_block_bytes=2 * 1024 * 1024):
    """Equivalent of MutilBCEWithLogitsLoss.forward(input, target).

    input_nchw, target_nchw : (N, C, H, W)  (f32 or bf16; math is f32)
    pos_weight              : (C,) per-channel positive-class weight
    Returns a scalar f32 loss (mean over all N*C*H*W elements).
    """
    N, C, H, W = input_nchw.shape
    rows = N * C
    hw = H * W
    itemsize = jnp.dtype(input_nchw.dtype).itemsize
    sub = 16 if itemsize == 2 else 8                 # sublane multiple

    # Pure-view reshape: lane axis = H*W (wide), rows = N*C.
    x = input_nchw.reshape(rows, hw)
    t = target_nchw.reshape(rows, hw)

    # ---- tile selection -----------------------------------------------------
    target_elems = max(1, target_block_bytes // itemsize)
    row_cap = (rows // sub) * sub if rows >= sub else rows
    col_cap = (hw // 128) * 128 if hw >= 128 else hw

    tm = min(row_cap, 256) if rows >= sub else rows
    if hw >= 128:
        tn = max(128, min(col_cap, (target_elems // max(tm, 1)) // 128 * 128))
    else:
        tn = hw                                       # full (tiny) lane dim

    n_row = pl.cdiv(rows, tm)
    n_col = pl.cdiv(hw, tn)
    # Aim for >= ~8 grid steps when data allows (v7x megacore + DMA overlap).
    if n_row * n_col < 8 and rows >= sub:
        want = min(-(-8 // n_col), rows // sub)
        if want > n_row:
            tm = min(row_cap, max(sub, _round_up(-(-rows // want), sub)))
            n_row = pl.cdiv(rows, tm)

    ragged_rows = (rows % tm) != 0
    ragged_cols = (hw % tn) != 0
    out_tm = 8 if tm % 8 == 0 else tm
    out_tn = 128 if tn % 128 == 0 else tn

    # Per-row pos_weight column (row -> channel = row % C), padded so the
    # in-kernel pl.ds slice of the resident block never reads out of bounds.
    padded_rows = n_row * tm
    pw = jnp.asarray(pos_weight, jnp.float32).reshape(1, C)
    pw_rows = jnp.tile(pw, (N, 1)).reshape(rows, 1)
    if padded_rows > rows:
        pw_rows = jnp.pad(pw_rows, ((0, padded_rows - rows), (0, 0)),
                          constant_values=1.0)

    kernel = functools.partial(
        _bce_tile_kernel, rows=rows, hw=hw, tm=tm, tn=tn,
        ragged_rows=ragged_rows, ragged_cols=ragged_cols)

    block_bytes = tm * tn * itemsize
    vmem_est = (2 * 2 * block_bytes            # double-buffered logits+targets
                + 8 * tm * tn * 4              # f32 elementwise temporaries
                + padded_rows * 128 * 4        # resident pos_weight column
                + 4 * 1024 * 1024)             # headroom
    vmem_limit = int(min(max(vmem_est, 16 * 1024 * 1024), 48 * 1024 * 1024))

    partials = pl.pallas_call(
        kernel,
        out_shape=jax.ShapeDtypeStruct((n_row * out_tm, n_col * out_tn),
                                       jnp.float32),
        grid_spec=pltpu.PrefetchScalarGridSpec(
            num_scalar_prefetch=0,
            grid=(n_row, n_col),
            in_specs=[
                pl.BlockSpec((tm, tn), lambda i, j: (i, j)),        # logits
                pl.BlockSpec((tm, tn), lambda i, j: (i, j)),        # targets
                pl.BlockSpec((padded_rows, 1), lambda i, j: (0, 0)),  # pos_weight (resident)
            ],
            out_specs=pl.BlockSpec((out_tm, out_tn), lambda i, j: (i, j)),
        ),
        compiler_params=pltpu.CompilerParams(
            dimension_semantics=("parallel", "parallel"),
            vmem_limit_bytes=vmem_limit,
        ),
    )(x, t, pw_rows)

    # Tiny final reduction + mean over every element.
    return (jnp.sum(partials) / jnp.float32(rows * hw)).astype(jnp.float32)


def _reference_loss(input_nchw, target_nchw, pos_weight):
    """Pure-JAX reference of torch.nn.BCEWithLogitsLoss(pos_weight=...)."""
    x = input_nchw.astype(jnp.float32)
    t = target_nchw.astype(jnp.float32)
    pw = jnp.asarray(pos_weight, jnp.float32).reshape(1, -1, 1, 1)
    log_weight = 1.0 + (pw - 1.0) * t
    elem = (1.0 - t) * x + log_weight * (
        jnp.log1p(jnp.exp(-jnp.abs(x))) + jnp.maximum(-x, 0.0))
    return jnp.mean(elem)


def _check(shape, pos_weight, key, *, dtype=jnp.float32, rtol=1e-5, atol=1e-5):
    k1, k2 = jax.random.split(key)
    logits = (jax.random.normal(k1, shape, dtype=jnp.float32) * 2.0).astype(dtype)
    target = (jax.random.uniform(k2, shape) > 0.5).astype(dtype)
    loss = jax.block_until_ready(
        multi_bce_with_logits_loss(logits, target, pos_weight))
    ref = jax.block_until_ready(
        _reference_loss(logits.astype(jnp.float32), target.astype(jnp.float32),
                        pos_weight))
    assert jnp.allclose(loss, ref, rtol=rtol, atol=atol), (shape, dtype, loss, ref)


if __name__ == "__main__":
    key = jax.random.PRNGKey(0)
    keys = jax.random.split(key, 5)
    pw4 = jnp.array([1.0, 2.0, 0.5, 1.5], dtype=jnp.float32)

    # Basic case: rows and H*W both align to (8, 128) tiles.
    _check((2, 4, 16, 16), pw4, keys[0])
    # Ragged rows: N*C = 12 not a multiple of the 8-row tile.
    _check((3, 4, 8, 16), jnp.array([0.25, 1.0, 3.0, 2.0], jnp.float32), keys[1])
    # Narrow spatial axis: H*W = 100 < 128 (full-dim lane block).
    _check((2, 4, 10, 10), pw4, keys[2])
    # Ragged lane tiles: H*W = 400 with a 384-wide lane tile.
    _check((2, 4, 20, 20), pw4, keys[3])
    # bf16 inputs (halved HBM traffic path); math stays f32 in-kernel.
    _check((4, 4, 16, 16), pw4, keys[4], dtype=jnp.bfloat16, rtol=1e-4, atol=1e-4)

    print("KERNEL_OK")
</pallas_src>

<mosaic_0001>
module attributes {stable_mosaic.version = 11 : i64} {
  func.func @_bce_tile_kernel(%arg0: i32, %arg1: i32, %arg2: memref<8x256xf32, #tpu.memory_space<vmem>>, %arg3: memref<8x256xf32, #tpu.memory_space<vmem>>, %arg4: memref<8x1xf32, #tpu.memory_space<vmem>>, %arg5: memref<8x128xf32, #tpu.memory_space<vmem>>) attributes {dimension_semantics = [#tpu.dimension_semantics<parallel>, #tpu.dimension_semantics<parallel>], iteration_bounds = array<i64: 1, 1>, scalar_prefetch = 0 : i64, scratch_operands = 0 : i64, tpu.core_type = #tpu.core_type<tc>, window_params = [{transform_indices = @transform_0, window_bounds = array<i64: 8, 256>}, {transform_indices = @transform_1, window_bounds = array<i64: 8, 256>}, {pipeline_mode = #tpu.pipeline_mode<synchronous>, transform_indices = @transform_2, window_bounds = array<i64: 8, 1>}, {transform_indices = @transform_3, window_bounds = array<i64: 8, 128>}]} {
    %c0 = arith.constant 0 : index
    %c0_0 = arith.constant 0 : index
    %0 = vector.load %arg2[%c0, %c0_0] : memref<8x256xf32, #tpu.memory_space<vmem>>, vector<8x256xf32>
    %c0_1 = arith.constant 0 : index
    %c0_2 = arith.constant 0 : index
    %1 = vector.load %arg3[%c0_1, %c0_2] : memref<8x256xf32, #tpu.memory_space<vmem>>, vector<8x256xf32>
    %c8_i32 = arith.constant 8 : i32
    %2 = arith.muli %arg0, %c8_i32 : i32
    %3 = tpu.assume_multiple %2, 8 : i32
    %4 = arith.index_cast %3 : i32 to index
    %c0_3 = arith.constant 0 : index
    %5 = vector.load %arg4[%4, %c0_3] : memref<8x1xf32, #tpu.memory_space<vmem>>, vector<8x1xf32>
    %cst = arith.constant 1.000000e+00 : f32
    %6 = vector.broadcast %cst : f32 to vector<8x1xf32>
    %7 = arith.subf %5, %6 : vector<8x1xf32>
    %8 = vector.broadcast %7 : vector<8x1xf32> to vector<8x256xf32>
    %9 = arith.mulf %8, %1 : vector<8x256xf32>
    %cst_4 = arith.constant 1.000000e+00 : f32
    %10 = vector.broadcast %cst_4 : f32 to vector<8x256xf32>
    %11 = arith.addf %10, %9 : vector<8x256xf32>
    %12 = math.absf %0 : vector<8x256xf32>
    %cst_5 = arith.constant 0.000000e+00 : f32
    %13 = vector.broadcast %cst_5 : f32 to vector<8x256xf32>
    %14 = arith.subf %13, %12 : vector<8x256xf32>
    %15 = math.exp %14 : vector<8x256xf32>
    %16 = math.log1p %15 : vector<8x256xf32>
    %cst_6 = arith.constant 0.000000e+00 : f32
    %17 = vector.broadcast %cst_6 : f32 to vector<8x256xf32>
    %18 = arith.subf %17, %0 : vector<8x256xf32>
    %cst_7 = arith.constant 0.000000e+00 : f32
    %19 = vector.broadcast %cst_7 : f32 to vector<8x256xf32>
    %20 = arith.maximumf %18, %19 : vector<8x256xf32>
    %21 = arith.addf %16, %20 : vector<8x256xf32>
    %cst_8 = arith.constant 1.000000e+00 : f32
    %22 = vector.broadcast %cst_8 : f32 to vector<8x256xf32>
    %23 = arith.subf %22, %1 : vector<8x256xf32>
    %24 = arith.mulf %23, %0 : vector<8x256xf32>
    %25 = arith.mulf %11, %21 : vector<8x256xf32>
    %26 = arith.addf %24, %25 : vector<8x256xf32>
    %27 = vector.extract_strided_slice %26 {offsets = [0, 0], sizes = [8, 128], strides = [1, 1]} : vector<8x256xf32> to vector<8x128xf32>
    %28 = vector.extract_strided_slice %26 {offsets = [0, 128], sizes = [8, 128], strides = [1, 1]} : vector<8x256xf32> to vector<8x128xf32>
    %29 = arith.addf %27, %28 : vector<8x128xf32>
    %c0_9 = arith.constant 0 : index
    %c0_10 = arith.constant 0 : index
    %30 = vector.load %arg5[%c0_9, %c0_10] : memref<8x128xf32, #tpu.memory_space<vmem>>, vector<8x128xf32>
    tpu.vector_store %arg5[%c0_9, %c0_10], %29 {strides = array<i32>} : memref<8x128xf32, #tpu.memory_space<vmem>>, vector<8x128xf32>,
    return
  }
  func.func @transform_0(%arg0: i32, %arg1: i32) -> (i32, i32) {
    %c0_i32 = arith.constant 0 : i32
    return %arg0, %arg1 : i32, i32
  }
  func.func @transform_1(%arg0: i32, %arg1: i32) -> (i32, i32) {
    %c0_i32 = arith.constant 0 : i32
    return %arg0, %arg1 : i32, i32
  }
  func.func @transform_2(%arg0: i32, %arg1: i32) -> (i32, i32) {
    %c0_i32 = arith.constant 0 : i32
    %c0_i32_0 = arith.constant 0 : i32
    %c0_i32_1 = arith.constant 0 : i32
    return %c0_i32, %c0_i32_0 : i32, i32
  }
  func.func @transform_3(%arg0: i32, %arg1: i32) -> (i32, i32) {
    %c0_i32 = arith.constant 0 : i32
    return %arg0, %arg1 : i32, i32
  }
}

</mosaic_0001>

<llo_original>
// kernel: tpu_custom_call.1
$region0: #{tpu_custom_call.1}
  #allocation0 [shape = 'u32[]', space=smem, size = 0x4, offset = 0x4, fixed_abs, tag = 'smem constant byte address 0x4 - core index']
  #allocation1 [shape = 'u32[144,128]{1,0:T(1,128)}', space=vmem, size = 0x12000, scoped, tag = 'internal scratch']
  %s0 = inlined_call_operand.hbm [shape: f32[8,256], index: 0, kind: input, shape index: {}]
  %s1 = inlined_call_operand.hbm [shape: f32[8,256], index: 1, kind: input, shape index: {}]
  %s2 = inlined_call_operand.vmem [shape: f32[8,1], index: 2, kind: input, shape index: {}]
  %s3 = inlined_call_operand.hbm [shape: f32[8,128], index: 3, kind: output, shape index: {}]
  %s4 = sld [smem:[#allocation0]]
  $region30: #{tpu_custom_call.1} parent=0
    _
  %s6 = ssub.s32 1, %s4
  %s7 = scalar_select 0, %s6, %s4
  $region1: #{tpu_custom_call.1} parent=0
    #allocation2 [shape = 'u8[8192]{0}', space=vmem, size = 0x2000, scoped, tag = 'input window, operand 0, single buffered']
    #allocation3 [shape = 's32[1]{0}', space=sflag, size = 0x4, scoped, tag = 'scoped memory for tpu_custom_call.1']
    #allocation4 [shape = 's32[1]{0}', space=sflag, size = 0x4, scoped, tag = 'scoped memory for tpu_custom_call.1']
    #allocation5 [shape = 'u8[8192]{0}', space=vmem, size = 0x2000, scoped, tag = 'input window, operand 1, single buffered']
    #allocation6 [shape = 's32[1]{0}', space=sflag, size = 0x4, scoped, tag = 'scoped memory for tpu_custom_call.1']
    #allocation7 [shape = 'u8[4096]{0}', space=vmem, size = 0x1000, scoped, tag = 'output window, operand 0, single buffered']
    %8 = vsyncpa [#allocation3], 0
    %9 = vsyncpa [#allocation6], 0
    %10 = vsyncpa [#allocation4], 0
    // Predicated region
    $region2: #{tpu_custom_call.1} parent=1 // pred_check
      _
    $region3: #{tpu_custom_call.1} parent=1 // pred_check_branch
      %12 = sbr.rel (0) target = $region5
    $region4: #{tpu_custom_call.1} parent=1 // pred_region
      %s14 = ssub.s32 256, 256
      %15 = vsyncadd [#allocation3], %s14
      %s17 = sshll.u32 [#allocation2], 4
      %s18 = int_to_ptr.vmem [resolvable:$true] %s17
      %20 = dma.hbm_to_vmem [thread:$0]  %s0, 256, %s18, [#allocation3]
    $region5: #{tpu_custom_call.1} parent=1 // pred_fallthru
      _
    // Predicated region
    $region6: #{tpu_custom_call.1} parent=1 // pred_check
      _
    $region7: #{tpu_custom_call.1} parent=1 // pred_check_branch
      %22 = sbr.rel (0) target = $region9
    $region8: #{tpu_custom_call.1} parent=1 // pred_region
      %s24 = ssub.s32 256, 256
      %25 = vsyncadd [#allocation6], %s24
      %s27 = sshll.u32 [#allocation5], 4
      %s28 = int_to_ptr.vmem [resolvable:$true] %s27
      %30 = dma.hbm_to_vmem [thread:$0]  %s1, 256, %s28, [#allocation6]
    $region9: #{tpu_custom_call.1} parent=1 // pred_fallthru
      _
    // Predicated region
    $region10: #{tpu_custom_call.1} parent=1 // pred_check
      _
    $region11: #{tpu_custom_call.1} parent=1 // pred_check_branch
      %32 = sbr.rel (0) target = $region13
    $region12: #{tpu_custom_call.1} parent=1 // pred_region
      _
    $region13: #{tpu_custom_call.1} parent=1 // pred_fallthru
      _
    // Predicated region
    $region14: #{tpu_custom_call.1} parent=1 // pred_check
      _
    $region15: #{tpu_custom_call.1} parent=1 // pred_check_branch
      %34 = sbr.rel (0) target = $region17
    $region16: #{tpu_custom_call.1} parent=1 // pred_region
      %35 = dma.done [#allocation3], 256
    $region17: #{tpu_custom_call.1} parent=1 // pred_fallthru
      _
    // Predicated region
    $region18: #{tpu_custom_call.1} parent=1 // pred_check
      _
    $region19: #{tpu_custom_call.1} parent=1 // pred_check_branch
      %37 = sbr.rel (0) target = $region21
    $region20: #{tpu_custom_call.1} parent=1 // pred_region
      %38 = dma.done [#allocation6], 256
    $region21: #{tpu_custom_call.1} parent=1 // pred_fallthru
      _
    %v39 = vld [vmem:[#allocation2] sm:$0xff]
    %v40 = vld [vmem:[#allocation2 + $0x8] sm:$0xff]
    %v41 = vld [vmem:[#allocation5] sm:$0xff]
    %v42 = vld [vmem:[#allocation5 + $0x8] sm:$0xff]
    %s43 = smul.u32 0, 8
    %s44 = scalar_lea.vmem %s2, %s43
    %v45 = vld [vmem:[%s44] sm:$0xff]
    %v46 = vsub.f32 %v45, 1.0
    %48 = vset.pattern.permute.xlu0 0
    %49 = vperm.xlu0 %48, %v46
    %v50 = vpop.permute.xlu0 %49
    %v52 = vmul.f32 %v50, %v41
    %v53 = vmul.f32 %v50, %v42
    %v54 = vadd.f32 %v52, 1.0
    %v55 = vadd.f32 %v53, 1.0
    %v56 = vand.u32 2147483647, %v39
    %v57 = vand.u32 2147483647, %v40
    %v58 = vsub.f32 0.0, %v56
    %v59 = vsub.f32 0.0, %v57
    %v60 = vmul.f32 %v58, 1.442695
    %v61 = vpow.pop %v60
    %v62 = vmul.f32 %v59, 1.442695
    %v63 = vpow.pop %v62
    %v64 = vadd.f32 %v61, 1.0
    %v65 = vlog2.pop %v64
    %v66 = vmul.f32 %v65, 0.6931472
    %v67 = vmul.f32 -0.5, %v61
    %v68 = vadd.f32 %v67, 1.0
    %v69 = vmul.f32 %v68, %v61
    %v70 = vand.u32 2147483647, %v61
    %vm71 = vcmp.lt.f32.partialorder %v70, 0.0004427343
    %v72 = vsel %vm71, %v69, %v66
    %v73 = vadd.f32 %v63, 1.0
    %v74 = vlog2.pop %v73
    %v75 = vmul.f32 %v74, 0.6931472
    %v76 = vmul.f32 -0.5, %v63
    %v77 = vadd.f32 %v76, 1.0
    %v78 = vmul.f32 %v77, %v63
    %v79 = vand.u32 2147483647, %v63
    %vm80 = vcmp.lt.f32.partialorder %v79, 0.0004427343
    %v81 = vsel %vm80, %v78, %v75
    %v82 = vsub.f32 0.0, %v39
    %v83 = vsub.f32 0.0, %v40
    %v84 = vmax.f32 %v82, 0.0
    %v85 = vmax.f32 %v83, 0.0
    %v86 = vadd.f32 %v72, %v84
    %v87 = vadd.f32 %v81, %v85
    %v88 = vsub.f32 1.0, %v41
    %v89 = vsub.f32 1.0, %v42
    %v90 = vmul.f32 %v88, %v39
    %v91 = vmul.f32 %v89, %v40
    %v92 = vmul.f32 %v54, %v86
    %v93 = vmul.f32 %v55, %v87
    %v94 = vadd.f32 %v90, %v92
    %v95 = vadd.f32 %v91, %v93
    %v96 = vadd.f32 %v94, %v95
    %97 = vst [vmem:[#allocation7] sm:$0xff] %v96
    // Predicated region
    $region22: #{tpu_custom_call.1} parent=1 // pred_check
      _
    $region23: #{tpu_custom_call.1} parent=1 // pred_check_branch
      %99 = sbr.rel (0) target = $region25
    $region24: #{tpu_custom_call.1} parent=1 // pred_region
      %s101 = ssub.s32 128, 128
      %102 = vsyncadd [#allocation4], %s101
      %s104 = sshll.u32 [#allocation7], 4
      %s105 = int_to_ptr.vmem [resolvable:$true] %s104
      %107 = dma.vmem_to_hbm [thread:$0]  %s105, 128, %s3, [#allocation4]
    $region25: #{tpu_custom_call.1} parent=1 // pred_fallthru
      _
    // Predicated region
    $region26: #{tpu_custom_call.1} parent=1 // pred_check
      _
    $region27: #{tpu_custom_call.1} parent=1 // pred_check_branch
      %109 = sbr.rel (0) target = $region29
    $region28: #{tpu_custom_call.1} parent=1 // pred_region
      %110 = dma.done [#allocation4], 128
    $region29: #{tpu_custom_call.1} parent=1 // pred_fallthru
      _
    %111 = vsyncpa [#allocation3], 1
    %112 = vsyncpa [#allocation6], 1
    %113 = vsyncpa [#allocation4], 1

</llo_original>
